<compile_context>
chip_gen: v7x
topology: tpu7x:2x2x1
jax: 0.10.0
libtpu: 0.0.40
codegen_flags: <defaults>
</compile_context>

<pallas_src>
import jax
import jax.numpy as jnp
from jax.experimental import pallas as pl
from jax.experimental.pallas import tpu as pltpu


def combiner_kernel(w1_ref, w2_ref, wt1_ref, wt2_ref, b_ref, o_ref):
    # Two MXU pushes into one f32 accumulator == matmul of the concatenation.
    acc = jnp.dot(w1_ref[...], wt1_ref[...], preferred_element_type=jnp.float32)
    acc = acc + jnp.dot(w2_ref[...], wt2_ref[...], preferred_element_type=jnp.float32)
    acc = acc + b_ref[...]                                   # broadcast (1, H), f32
    o_ref[...] = jnp.maximum(acc, 0.0).astype(o_ref.dtype)   # clamp(min=0)


def _round_up8(x):
    return ((x + 7) // 8) * 8


def combiner_forward(word1, word2, w_t, bias, *, tile_b=1024,
                     out_dtype=jnp.float32, compute_dtype=jnp.bfloat16):
    """word1, word2: (B, H).  w_t: (2H, H) == Linear weight transposed.  bias: (1, H)."""
    B, H = word1.shape
    assert word2.shape == (B, H)
    assert w_t.shape == (2 * H, H)
    assert bias.shape == (1, H)

    # Cast to the MXU-native compute dtype in the wrapper (halves HBM traffic).
    w1 = word1.astype(compute_dtype)
    w2 = word2.astype(compute_dtype)
    wt1 = w_t[:H, :].astype(compute_dtype)   # multiplies word1 (resident)
    wt2 = w_t[H:, :].astype(compute_dtype)   # multiplies word2 (resident)
    b_f32 = bias.astype(jnp.float32)         # added to the f32 accumulator

    # Batch tile: multiple of 8 sublanes, as large as possible, but capped at
    # ceil(B/2) so there are >= 2 grid steps (keeps both v7x TCs busy).
    if B > 8:
        tb = min(tile_b, _round_up8(-(-B // 2)))
    else:
        tb = _round_up8(B)
    tb = max(8, (tb // 8) * 8)
    num_tiles = pl.cdiv(B, tb)

    in_isz = jnp.dtype(compute_dtype).itemsize
    out_isz = jnp.dtype(out_dtype).itemsize
    cost = pl.CostEstimate(
        flops=4 * B * H * H,                       # two (B,H)x(H,H) matmuls
        transcendentals=0,
        bytes_accessed=(2 * B * H * in_isz         # activations in
                        + 2 * H * H * in_isz       # resident weight halves
                        + H * 4                    # bias
                        + B * H * out_isz),        # output
    )

    out = pl.pallas_call(
        combiner_kernel,
        out_shape=jax.ShapeDtypeStruct((B, H), out_dtype),
        grid_spec=pltpu.PrefetchScalarGridSpec(
            num_scalar_prefetch=0,
            grid=(num_tiles,),
            in_specs=[
                pl.BlockSpec((tb, H), lambda i: (i, 0)),    # word1 tile
                pl.BlockSpec((tb, H), lambda i: (i, 0)),    # word2 tile
                pl.BlockSpec((H, H), lambda i: (0, 0)),     # Wt[:H]  (resident)
                pl.BlockSpec((H, H), lambda i: (0, 0)),     # Wt[H:]  (resident)
                pl.BlockSpec((1, H), lambda i: (0, 0)),     # bias    (resident)
            ],
            out_specs=pl.BlockSpec((tb, H), lambda i: (i, 0)),
        ),
        compiler_params=pltpu.CompilerParams(
            dimension_semantics=("parallel",),
            vmem_limit_bytes=64 * 1024 * 1024,
        ),
        cost_estimate=cost,
    )(w1, w2, wt1, wt2, b_f32)

    return out


def combiner_reference(word1, word2, w_t, bias, compute_dtype=jnp.bfloat16):
    # Reference with the same bf16 input quantization, f32 accumulation.
    x1 = word1.astype(compute_dtype).astype(jnp.float32)
    x2 = word2.astype(compute_dtype).astype(jnp.float32)
    wt = w_t.astype(compute_dtype).astype(jnp.float32)
    x = jnp.concatenate([x1, x2], axis=1)
    return jnp.maximum(x @ wt + bias.astype(jnp.float32), 0.0)


if __name__ == "__main__":
    H = 128   # small demo hidden size, multiple of 128 for lane-dense output
    key = jax.random.PRNGKey(0)
    k1, k2, kw, kb = jax.random.split(key, 4)

    # Deterministic parameter init mimicking nn.Linear(2H, H):
    # uniform(-1/sqrt(fan_in), 1/sqrt(fan_in)), fan_in = 2H.
    bound = 1.0 / jnp.sqrt(2.0 * H)
    w = jax.random.uniform(kw, (H, 2 * H), dtype=jnp.float32,
                           minval=-bound, maxval=bound)   # PyTorch layout (out, in)
    b = jax.random.uniform(kb, (H,), dtype=jnp.float32,
                           minval=-bound, maxval=bound)
    w_t = w.T                      # (2H, H) for x @ W_t
    bias = b.reshape(1, H)

    ok = True
    # Case 1: batch split evenly into 2 tiles.
    # Case 2: ragged batch exercising the partial trailing block (no jnp.pad).
    for B in (512, 200):
        ka, kb2 = jax.random.split(jax.random.fold_in(key, B))
        word1 = jax.random.normal(ka, (B, H), dtype=jnp.float32)
        word2 = jax.random.normal(kb2, (B, H), dtype=jnp.float32)

        out = combiner_forward(word1, word2, w_t, bias)
        out = jax.block_until_ready(out)

        ref = combiner_reference(word1, word2, w_t, bias)
        ok &= out.shape == (B, H)
        ok &= bool(jnp.allclose(out, ref, atol=2e-3, rtol=2e-3))

    assert ok, "mismatch vs reference"
    print("KERNEL_OK")
</pallas_src>

<mosaic_0001>
module attributes {stable_mosaic.version = 11 : i64} {
  func.func @combiner_kernel(%arg0: i32, %arg1: memref<256x128xbf16, #tpu.memory_space<vmem>>, %arg2: memref<256x128xbf16, #tpu.memory_space<vmem>>, %arg3: memref<128x128xbf16, #tpu.memory_space<vmem>>, %arg4: memref<128x128xbf16, #tpu.memory_space<vmem>>, %arg5: memref<1x128xf32, #tpu.memory_space<vmem>>, %arg6: memref<256x128xf32, #tpu.memory_space<vmem>>) attributes {dimension_semantics = [#tpu.dimension_semantics<parallel>], iteration_bounds = array<i64: 2>, scalar_prefetch = 0 : i64, scratch_operands = 0 : i64, tpu.core_type = #tpu.core_type<tc>, window_params = [{transform_indices = @transform_0, window_bounds = array<i64: 256, 128>}, {transform_indices = @transform_1, window_bounds = array<i64: 256, 128>}, {pipeline_mode = #tpu.pipeline_mode<synchronous>, transform_indices = @transform_2, window_bounds = array<i64: 128, 128>}, {pipeline_mode = #tpu.pipeline_mode<synchronous>, transform_indices = @transform_3, window_bounds = array<i64: 128, 128>}, {pipeline_mode = #tpu.pipeline_mode<synchronous>, transform_indices = @transform_4, window_bounds = array<i64: 1, 128>}, {transform_indices = @transform_5, window_bounds = array<i64: 256, 128>}]} {
    %c0 = arith.constant 0 : index
    %c0_0 = arith.constant 0 : index
    %0 = vector.load %arg1[%c0, %c0_0] : memref<256x128xbf16, #tpu.memory_space<vmem>>, vector<256x128xbf16>
    %c0_1 = arith.constant 0 : index
    %c0_2 = arith.constant 0 : index
    %1 = vector.load %arg3[%c0_1, %c0_2] : memref<128x128xbf16, #tpu.memory_space<vmem>>, vector<128x128xbf16>
    %cst = arith.constant dense<0.000000e+00> : vector<256x128xf32>
    %2 = tpu.matmul %0, %1, %cst {dimension_numbers = #tpu.dot_dimension_numbers<[1], [0], [0], [1], [0, 0, 1, 1], [], []>} : vector<256x128xbf16>, vector<128x128xbf16>, vector<256x128xf32> -> vector<256x128xf32>
    %c0_3 = arith.constant 0 : index
    %c0_4 = arith.constant 0 : index
    %3 = vector.load %arg2[%c0_3, %c0_4] : memref<256x128xbf16, #tpu.memory_space<vmem>>, vector<256x128xbf16>
    %c0_5 = arith.constant 0 : index
    %c0_6 = arith.constant 0 : index
    %4 = vector.load %arg4[%c0_5, %c0_6] : memref<128x128xbf16, #tpu.memory_space<vmem>>, vector<128x128xbf16>
    %cst_7 = arith.constant dense<0.000000e+00> : vector<256x128xf32>
    %5 = tpu.matmul %3, %4, %cst_7 {dimension_numbers = #tpu.dot_dimension_numbers<[1], [0], [0], [1], [0, 0, 1, 1], [], []>} : vector<256x128xbf16>, vector<128x128xbf16>, vector<256x128xf32> -> vector<256x128xf32>
    %6 = arith.addf %2, %5 : vector<256x128xf32>
    %c0_8 = arith.constant 0 : index
    %c0_9 = arith.constant 0 : index
    %7 = vector.load %arg5[%c0_8, %c0_9] : memref<1x128xf32, #tpu.memory_space<vmem>>, vector<1x128xf32>
    %8 = vector.broadcast %7 : vector<1x128xf32> to vector<256x128xf32>
    %9 = arith.addf %6, %8 : vector<256x128xf32>
    %cst_10 = arith.constant 0.000000e+00 : f32
    %10 = vector.broadcast %cst_10 : f32 to vector<256x128xf32>
    %11 = arith.maximumf %9, %10 : vector<256x128xf32>
    %c0_11 = arith.constant 0 : index
    %c0_12 = arith.constant 0 : index
    %12 = vector.load %arg6[%c0_11, %c0_12] : memref<256x128xf32, #tpu.memory_space<vmem>>, vector<256x128xf32>
    tpu.vector_store %arg6[%c0_11, %c0_12], %11 {strides = array<i32>} : memref<256x128xf32, #tpu.memory_space<vmem>>, vector<256x128xf32>,
    return
  }
  func.func @transform_0(%arg0: i32) -> (i32, i32) {
    %c0_i32 = arith.constant 0 : i32
    %c0_i32_0 = arith.constant 0 : i32
    return %arg0, %c0_i32 : i32, i32
  }
  func.func @transform_1(%arg0: i32) -> (i32, i32) {
    %c0_i32 = arith.constant 0 : i32
    %c0_i32_0 = arith.constant 0 : i32
    return %arg0, %c0_i32 : i32, i32
  }
  func.func @transform_2(%arg0: i32) -> (i32, i32) {
    %c0_i32 = arith.constant 0 : i32
    %c0_i32_0 = arith.constant 0 : i32
    %c0_i32_1 = arith.constant 0 : i32
    return %c0_i32, %c0_i32_0 : i32, i32
  }
  func.func @transform_3(%arg0: i32) -> (i32, i32) {
    %c0_i32 = arith.constant 0 : i32
    %c0_i32_0 = arith.constant 0 : i32
    %c0_i32_1 = arith.constant 0 : i32
    return %c0_i32, %c0_i32_0 : i32, i32
  }
  func.func @transform_4(%arg0: i32) -> (i32, i32) {
    %c0_i32 = arith.constant 0 : i32
    %c0_i32_0 = arith.constant 0 : i32
    %c0_i32_1 = arith.constant 0 : i32
    return %c0_i32, %c0_i32_0 : i32, i32
  }
  func.func @transform_5(%arg0: i32) -> (i32, i32) {
    %c0_i32 = arith.constant 0 : i32
    %c0_i32_0 = arith.constant 0 : i32
    return %arg0, %c0_i32 : i32, i32
  }
}

</mosaic_0001>

<llo_original>
// kernel: tpu_custom_call.1
$region0: #{tpu_custom_call.1}
  #allocation0 [shape = 'u32[]', space=smem, size = 0x4, offset = 0x4, fixed_abs, tag = 'smem constant byte address 0x4 - core index']
  #allocation1 [shape = 'u32[144,128]{1,0:T(1,128)}', space=vmem, size = 0x12000, scoped, tag = 'internal scratch']
  %s0 = inlined_call_operand.hbm [shape: bf16[512,128], index: 0, kind: input, shape index: {}]
  %s1 = inlined_call_operand.hbm [shape: bf16[512,128], index: 1, kind: input, shape index: {}]
  %s2 = inlined_call_operand.hbm [shape: bf16[128,128], index: 2, kind: input, shape index: {}]
  %s3 = inlined_call_operand.hbm [shape: bf16[128,128], index: 3, kind: input, shape index: {}]
  %s4 = inlined_call_operand.hbm [shape: f32[1,128], index: 4, kind: input, shape index: {}]
  %s5 = inlined_call_operand.hbm [shape: f32[512,128], index: 5, kind: output, shape index: {}]
  %s6 = sld [smem:[#allocation0]]
  $region73: #{tpu_custom_call.1} parent=0
    _
  %s8 = ssub.s32 1, %s6
  %s9 = scalar_select 0, %s8, %s6
  $region1: #{tpu_custom_call.1} parent=0
    #allocation2 [shape = 'u8[131072]{0}', space=vmem, size = 0x20000, scoped, tag = 'input window, operand 0']
    #allocation3 [shape = 's32[2]{0}', space=sflag, size = 0x8, scoped, tag = 'scoped memory for tpu_custom_call.1']
    #allocation4 [shape = 's32[2]{0}', space=sflag, size = 0x8, scoped, tag = 'scoped memory for tpu_custom_call.1']
    #allocation5 [shape = 'u8[131072]{0}', space=vmem, size = 0x20000, scoped, tag = 'input window, operand 1']
    #allocation6 [shape = 's32[2]{0}', space=sflag, size = 0x8, scoped, tag = 'scoped memory for tpu_custom_call.1']
    #allocation7 [shape = 'u8[32768]{0}', space=vmem, size = 0x8000, scoped, tag = 'input window, operand 2, single buffered']
    #allocation8 [shape = 'u8[32768]{0}', space=vmem, size = 0x8000, scoped, tag = 'input window, operand 3, single buffered']
    #allocation9 [shape = 's32[1]{0}', space=sflag, size = 0x4, scoped, tag = 'scoped memory for tpu_custom_call.1']
    #allocation10 [shape = 'u8[512]{0}', space=vmem, size = 0x400, scoped, tag = 'input window, operand 4, single buffered']
    #allocation11 [shape = 'u8[262144]{0}', space=vmem, size = 0x40000, scoped, tag = 'output window, operand 0']
    %10 = vsyncpa [#allocation3], 0
    %s11 = scalar_lea.sflag [#allocation3], 1
    %12 = vsyncpa %s11, 0
    %13 = vsyncpa [#allocation6], 0
    %s14 = scalar_lea.sflag [#allocation6], 1
    %15 = vsyncpa %s14, 0
    %16 = vsyncpa [#allocation9], 0
    %17 = vsyncpa [#allocation4], 0
    %s18 = scalar_lea.sflag [#allocation4], 1
    %19 = vsyncpa %s18, 0
    loop: start=0, step=1, limit=4
    $region2: #{tpu_custom_call.1} parent=1 // loop_pre_header
      _
    $region3: #{tpu_custom_call.1} parent=1 // loop_header
      %s21 = sphi 0, %s25
      %p22 = scmp.ge.s32.totalorder %s21, 4
      %s31 = sphi 0, %s33
      %s34 = sphi 0, %s31
      %s35 = sphi 0, %s34
      %s51 = sphi 0, %s35
      %s57 = sphi 0, %s59
      %s60 = sphi 0, %s57
      %s61 = sphi 0, %s60
      %s77 = sphi 0, %s61
      %s81 = sphi 0, %s81
      %s83 = sphi 0, %s81
      %s84 = sphi 0, %s83
      %s98 = sphi 0, %s84
      %s102 = sphi 0, %s102
      %s104 = sphi 0, %s102
      %s105 = sphi 0, %s104
      %s119 = sphi 0, %s105
      %s123 = sphi 0, %s123
      %s125 = sphi 0, %s123
      %s126 = sphi 0, %s125
      %s140 = sphi 0, %s126
      %s146 = sphi 0, %s148
      %s149 = sphi 0, %s146
      %s150 = sphi 0, %s149
      %s166 = sphi 0, %s150
    $region4: #{tpu_custom_call.1} parent=1 // loop_header_branch
      %24 = sbr.rel (%p22) target = $region8
    $region5: #{tpu_custom_call.1} parent=1 // loop_body
      %s26 = ssub.s32 %s21, 1
      %s27 = ssub.s32 %s21, 2
      %s28 = sadd.s32 %s21, 1
      %s29 = ssub.s32 %s21, %s28
      %p30 = scmp.eq.s32.totalorder %s29, 0
      %s32 = sadd.s32 %s31, 1
      %s33 = scalar_select %p30, %s31, %s32
      %p36 = pneg %p30
      %p37 = scmp.eq.s32.totalorder %s21, 1
      %p38 = por %p36, %p37
      %p39 = scmp.ne.s32.totalorder %s31, %s34
      %p40 = scmp.eq.s32.totalorder %s21, 0
      %p41 = por %p39, %p40
      %p42 = scmp.ne.s32.totalorder %s31, %s34
      %p43 = scmp.eq.s32.totalorder %s26, 1
      %p44 = por %p42, %p43
      %p45 = scmp.ne.s32.totalorder %s34, %s35
      %p46 = scmp.eq.s32.totalorder %s26, 0
      %p47 = por %p45, %p46
      %p48 = scmp.ne.s32.totalorder %s34, %s35
      %p49 = scmp.eq.s32.totalorder %s27, 1
      %p50 = por %p48, %p49
      %p52 = scmp.ne.s32.totalorder %s35, %s51
      %p53 = scmp.eq.s32.totalorder %s27, 0
      %p54 = por %p52, %p53
      %s55 = ssub.s32 %s21, %s28
      %p56 = scmp.eq.s32.totalorder %s55, 0
      %s58 = sadd.s32 %s57, 1
      %s59 = scalar_select %p56, %s57, %s58
      %p62 = pneg %p56
      %p63 = scmp.eq.s32.totalorder %s21, 1
      %p64 = por %p62, %p63
      %p65 = scmp.ne.s32.totalorder %s57, %s60
      %p66 = scmp.eq.s32.totalorder %s21, 0
      %p67 = por %p65, %p66
      %p68 = scmp.ne.s32.totalorder %s57, %s60
      %p69 = scmp.eq.s32.totalorder %s26, 1
      %p70 = por %p68, %p69
      %p71 = scmp.ne.s32.totalorder %s60, %s61
      %p72 = scmp.eq.s32.totalorder %s26, 0
      %p73 = por %p71, %p72
      %p74 = scmp.ne.s32.totalorder %s60, %s61
      %p75 = scmp.eq.s32.totalorder %s27, 1
      %p76 = por %p74, %p75
      %p78 = scmp.ne.s32.totalorder %s61, %s77
      %p79 = scmp.eq.s32.totalorder %s27, 0
      %p80 = por %p78, %p79
      %s82 = sadd.s32 %s81, 1
      %p85 = scmp.eq.s32.totalorder %s21, 1
      %p86 = scmp.ne.s32.totalorder %s81, %s83
      %p87 = scmp.eq.s32.totalorder %s21, 0
      %p88 = por %p86, %p87
      %p89 = scmp.ne.s32.totalorder %s81, %s83
      %p90 = scmp.eq.s32.totalorder %s26, 1
      %p91 = por %p89, %p90
      %p92 = scmp.ne.s32.totalorder %s83, %s84
      %p93 = scmp.eq.s32.totalorder %s26, 0
      %p94 = por %p92, %p93
      %p95 = scmp.ne.s32.totalorder %s83, %s84
      %p96 = scmp.eq.s32.totalorder %s27, 1
      %p97 = por %p95, %p96
      %p99 = scmp.ne.s32.totalorder %s84, %s98
      %p100 = scmp.eq.s32.totalorder %s27, 0
      %p101 = por %p99, %p100
      %s103 = sadd.s32 %s102, 1
      %p106 = scmp.eq.s32.totalorder %s21, 1
      %p107 = scmp.ne.s32.totalorder %s102, %s104
      %p108 = scmp.eq.s32.totalorder %s21, 0
      %p109 = por %p107, %p108
      %p110 = scmp.ne.s32.totalorder %s102, %s104
      %p111 = scmp.eq.s32.totalorder %s26, 1
      %p112 = por %p110, %p111
      %p113 = scmp.ne.s32.totalorder %s104, %s105
      %p114 = scmp.eq.s32.totalorder %s26, 0
      %p115 = por %p113, %p114
      %p116 = scmp.ne.s32.totalorder %s104, %s105
      %p117 = scmp.eq.s32.totalorder %s27, 1
      %p118 = por %p116, %p117
      %p120 = scmp.ne.s32.totalorder %s105, %s119
      %p121 = scmp.eq.s32.totalorder %s27, 0
      %p122 = por %p120, %p121
      %s124 = sadd.s32 %s123, 1
      %p127 = scmp.eq.s32.totalorder %s21, 1
      %p128 = scmp.ne.s32.totalorder %s123, %s125
      %p129 = scmp.eq.s32.totalorder %s21, 0
      %p130 = por %p128, %p129
      %p131 = scmp.ne.s32.totalorder %s123, %s125
      %p132 = scmp.eq.s32.totalorder %s26, 1
      %p133 = por %p131, %p132
      %p134 = scmp.ne.s32.totalorder %s125, %s126
      %p135 = scmp.eq.s32.totalorder %s26, 0
      %p136 = por %p134, %p135
      %p137 = scmp.ne.s32.totalorder %s125, %s126
      %p138 = scmp.eq.s32.totalorder %s27, 1
      %p139 = por %p137, %p138
      %p141 = scmp.ne.s32.totalorder %s126, %s140
      %p142 = scmp.eq.s32.totalorder %s27, 0
      %p143 = por %p141, %p142
      %s144 = ssub.s32 %s21, %s28
      %p145 = scmp.eq.s32.totalorder %s144, 0
      %s147 = sadd.s32 %s146, 1
      %s148 = scalar_select %p145, %s146, %s147
      %p151 = pneg %p145
      %p152 = scmp.eq.s32.totalorder %s21, 1
      %p153 = por %p151, %p152
      %p154 = scmp.ne.s32.totalorder %s146, %s149
      %p155 = scmp.eq.s32.totalorder %s21, 0
      %p156 = por %p154, %p155
      %p157 = scmp.ne.s32.totalorder %s146, %s149
      %p158 = scmp.eq.s32.totalorder %s26, 1
      %p159 = por %p157, %p158
      %p160 = scmp.ne.s32.totalorder %s149, %s150
      %p161 = scmp.eq.s32.totalorder %s26, 0
      %p162 = por %p160, %p161
      %p163 = scmp.ne.s32.totalorder %s149, %s150
      %p164 = scmp.eq.s32.totalorder %s27, 1
      %p165 = por %p163, %p164
      %p167 = scmp.ne.s32.totalorder %s150, %s166
      %p168 = scmp.eq.s32.totalorder %s27, 0
      %p169 = por %p167, %p168
      %p170 = scmp.le.s32.totalorder 1, %s21
      %p171 = scmp.lt.s32.totalorder %s21, 3
      %p172 = pnand %p170, %p171
      %p173 = pneg %p172
      // Predicated region
      $region9: #{tpu_custom_call.1} parent=5 // pred_check
        _
      $region10: #{tpu_custom_call.1} parent=5 // pred_check_branch
        %175 = sbr.rel (%p172) target = $region12
      $region11: #{tpu_custom_call.1} parent=5 // pred_region
        %s176 = ssub.s32 %s21, 1
        // Predicated region
        $region13: #{tpu_custom_call.1} parent=11 // pred_check
          %p177 = pneg %p94
        $region14: #{tpu_custom_call.1} parent=11 // pred_check_branch
          %179 = sbr.rel (%p177) target = $region16
        $region15: #{tpu_custom_call.1} parent=11 // pred_region
          %s181 = ssub.s32 1024, 1024
          %182 = vsyncadd [#allocation6], %s181
          %s183 = sshll.u32 [#allocation7], 4
          %s184 = int_to_ptr.vmem [resolvable:$true] %s183
          %189 = dma.hbm_to_vmem [thread:$0]  %s2, 1024, %s184, [#allocation6], 64, 64, 4
        $region16: #{tpu_custom_call.1} parent=11 // pred_fallthru
          _
        // Predicated region
        $region17: #{tpu_custom_call.1} parent=11 // pred_check
          %p190 = pneg %p115
        $region18: #{tpu_custom_call.1} parent=11 // pred_check_branch
          %192 = sbr.rel (%p190) target = $region20
        $region19: #{tpu_custom_call.1} parent=11 // pred_region
          %s194 = ssub.s32 1024, 1024
          %195 = vsyncadd [#allocation9], %s194
          %s196 = sshll.u32 [#allocation8], 4
          %s197 = int_to_ptr.vmem [resolvable:$true] %s196
          %202 = dma.hbm_to_vmem [thread:$0]  %s3, 1024, %s197, [#allocation9], 64, 64, 4
        $region20: #{tpu_custom_call.1} parent=11 // pred_fallthru
          _
        // Predicated region
        $region21: #{tpu_custom_call.1} parent=11 // pred_check
          %p203 = pneg %p136
        $region22: #{tpu_custom_call.1} parent=11 // pred_check_branch
          %205 = sbr.rel (%p203) target = $region24
        $region23: #{tpu_custom_call.1} parent=11 // pred_region
          %s207 = ssub.s32 16, 16
          %208 = vsyncadd [#allocation9], %s207
          %s210 = sshll.u32 [#allocation10], 4
          %s211 = int_to_ptr.vmem [resolvable:$true] %s210
          %213 = dma.hbm_to_vmem [thread:$0]  %s4, 16, %s211, [#allocation9]
        $region24: #{tpu_custom_call.1} parent=11 // pred_fallthru
          _
      $region12: #{tpu_custom_call.1} parent=5 // pred_fallthru
        _
      %p214 = scmp.lt.s32.totalorder %s21, 2
      // Predicated region
      $region25: #{tpu_custom_call.1} parent=5 // pred_check
        %p215 = pneg %p214
      $region26: #{tpu_custom_call.1} parent=5 // pred_check_branch
        %217 = sbr.rel (%p215) target = $region28
      $region27: #{tpu_custom_call.1} parent=5 // pred_region
        // Predicated region
        $region29: #{tpu_custom_call.1} parent=27 // pred_check
          %p218 = pneg %p41
        $region30: #{tpu_custom_call.1} parent=27 // pred_check_branch
          %220 = sbr.rel (%p218) target = $region32
        $region31: #{tpu_custom_call.1} parent=27 // pred_region
          %s221 = sand.u32 %s31, 1
          %s222 = scalar_lea.sflag [#allocation3], %s221
          %s223 = sand.u32 %s31, 1
          %s224 = smul.addr %s223, 128
          %s225 = scalar_lea.vmem [#allocation2], %s224
          %s226 = smul.u32 32, %s21
          %s228 = ssub.s32 2048, 2048
          %229 = vsyncadd %s222, %s228
          %s230 = smul.addr %s226, 64
          %s231 = scalar_lea.hbm %s0, %s230
          %s232 = sshll.u32 %s225, 4
          %s233 = int_to_ptr.vmem [resolvable:$true] %s232
          %238 = dma.hbm_to_vmem [thread:$0]  %s231, 2048, %s233, %s222, 64, 64, 4
        $region32: #{tpu_custom_call.1} parent=27 // pred_fallthru
          _
        // Predicated region
        $region33: #{tpu_custom_call.1} parent=27 // pred_check
          %p239 = pneg %p67
        $region34: #{tpu_custom_call.1} parent=27 // pred_check_branch
          %241 = sbr.rel (%p239) target = $region36
        $region35: #{tpu_custom_call.1} parent=27 // pred_region
          %s242 = sand.u32 %s21, 1
          %s243 = scalar_lea.sflag [#allocation6], %s242
          %s244 = sand.u32 %s57, 1
          %s245 = smul.addr %s244, 128
          %s246 = scalar_lea.vmem [#allocation5], %s245
          %s247 = smul.u32 32, %s21
          %s249 = ssub.s32 2048, 2048
          %250 = vsyncadd %s243, %s249
          %s251 = smul.addr %s247, 64
          %s252 = scalar_lea.hbm %s1, %s251
          %s253 = sshll.u32 %s246, 4
          %s254 = int_to_ptr.vmem [resolvable:$true] %s253
          %259 = dma.hbm_to_vmem [thread:$0]  %s252, 2048, %s254, %s243, 64, 64, 4
        $region36: #{tpu_custom_call.1} parent=27 // pred_fallthru
          _
      $region28: #{tpu_custom_call.1} parent=5 // pred_fallthru
        _
      %p260 = scmp.le.s32.totalorder 1, %s21
      %p261 = scmp.lt.s32.totalorder %s21, 3
      %p262 = pnand %p260, %p261
      %p263 = pneg %p262
      // Predicated region
      $region37: #{tpu_custom_call.1} parent=5 // pred_check
        _
      $region38: #{tpu_custom_call.1} parent=5 // pred_check_branch
        %265 = sbr.rel (%p262) target = $region40
      $region39: #{tpu_custom_call.1} parent=5 // pred_region
        %s266 = ssub.s32 %s21, 1
        %s267 = sand.u32 %s34, 1
        %s268 = scalar_lea.sflag [#allocation3], %s267
        %s269 = sand.u32 %s34, 1
        %s270 = smul.addr %s269, 128
        %s271 = scalar_lea.vmem [#allocation2], %s270
        // Predicated region
        $region41: #{tpu_custom_call.1} parent=39 // pred_check
          %p272 = pneg %p47
        $region42: #{tpu_custom_call.1} parent=39 // pred_check_branch
          %274 = sbr.rel (%p272) target = $region44
        $region43: #{tpu_custom_call.1} parent=39 // pred_region
          %275 = dma.done %s268, 2048
        $region44: #{tpu_custom_call.1} parent=39 // pred_fallthru
          _
        %s276 = sand.u32 %s26, 1
        %s277 = scalar_lea.sflag [#allocation6], %s276
        %s278 = sand.u32 %s60, 1
        %s279 = smul.addr %s278, 128
        %s280 = scalar_lea.vmem [#allocation5], %s279
        // Predicated region
        $region45: #{tpu_custom_call.1} parent=39 // pred_check
          %p281 = pneg %p73
        $region46: #{tpu_custom_call.1} parent=39 // pred_check_branch
          %283 = sbr.rel (%p281) target = $region48
        $region47: #{tpu_custom_call.1} parent=39 // pred_region
          %284 = dma.done %s277, 2048
        $region48: #{tpu_custom_call.1} parent=39 // pred_fallthru
          _
        // Predicated region
        $region49: #{tpu_custom_call.1} parent=39 // pred_check
          %p285 = pneg %p94
        $region50: #{tpu_custom_call.1} parent=39 // pred_check_branch
          %287 = sbr.rel (%p285) target = $region52
        $region51: #{tpu_custom_call.1} parent=39 // pred_region
          %288 = dma.done [#allocation6], 1024
        $region52: #{tpu_custom_call.1} parent=39 // pred_fallthru
          _
        // Predicated region
        $region53: #{tpu_custom_call.1} parent=39 // pred_check
          %p289 = pneg %p115
        $region54: #{tpu_custom_call.1} parent=39 // pred_check_branch
          %291 = sbr.rel (%p289) target = $region56
        $region55: #{tpu_custom_call.1} parent=39 // pred_region
          %292 = dma.done [#allocation9], 1024
        $region56: #{tpu_custom_call.1} parent=39 // pred_fallthru
          _
        // Predicated region
        $region57: #{tpu_custom_call.1} parent=39 // pred_check
          %p293 = pneg %p136
        $region58: #{tpu_custom_call.1} parent=39 // pred_check_branch
          %295 = sbr.rel (%p293) target = $region60
        $region59: #{tpu_custom_call.1} parent=39 // pred_region
          %296 = dma.done [#allocation9], 16
        $region60: #{tpu_custom_call.1} parent=39 // pred_fallthru
          _
        %s297 = sand.u32 %s34, 1
        %s298 = scalar_lea.sflag [#allocation3], %s297
        %s299 = sand.u32 %s34, 1
        %s300 = smul.addr %s299, 128
        %s301 = scalar_lea.vmem [#allocation2], %s300
        %p302 = pneg %p47
        %p303 = pneg %p44
        %s304 = sand.u32 %s26, 1
        %s305 = scalar_lea.sflag [#allocation6], %s304
        %s306 = sand.u32 %s60, 1
        %s307 = smul.addr %s306, 128
        %s308 = scalar_lea.vmem [#allocation5], %s307
        %p309 = pneg %p73
        %p310 = pneg %p70
        %p311 = pneg %p94
        %p312 = pneg %p91
        %p313 = pneg %p115
        %p314 = pneg %p112
        %p315 = pneg %p136
        %p316 = pneg %p133
        %p317 = pneg %p162
        %p318 = pneg %p159
        %s319 = sand.u32 %s149, 1
        %s320 = scalar_lea.sflag [#allocation4], %s319
        %s321 = sand.u32 %s149, 1
        %s322 = smul.addr %s321, 256
        %s323 = scalar_lea.vmem [#allocation11], %s322
        %s324 = smul.u32 32, %s26
        %s325 = smul.u32 32, %s26
        %s326 = smul.u32 32, %s26
        %v328 = vld [vmem:[%s271] sm:$0xf]
        %v329 = vld [vmem:[%s271 + $0x4] sm:$0xf]
        %v330 = vld [vmem:[%s271 + $0x8] sm:$0xf]
        %v331 = vld [vmem:[%s271 + $0xc] sm:$0xf]
        %v332 = vld [vmem:[%s271 + $0x10] sm:$0xf]
        %v333 = vld [vmem:[%s271 + $0x14] sm:$0xf]
        %v334 = vld [vmem:[%s271 + $0x18] sm:$0xf]
        %v335 = vld [vmem:[%s271 + $0x1c] sm:$0xf]
        %v336 = vld [vmem:[%s271 + $0x20] sm:$0xf]
        %v337 = vld [vmem:[%s271 + $0x24] sm:$0xf]
        %v338 = vld [vmem:[%s271 + $0x28] sm:$0xf]
        %v339 = vld [vmem:[%s271 + $0x2c] sm:$0xf]
        %v340 = vld [vmem:[%s271 + $0x30] sm:$0xf]
        %v341 = vld [vmem:[%s271 + $0x34] sm:$0xf]
        %v342 = vld [vmem:[%s271 + $0x38] sm:$0xf]
        %v343 = vld [vmem:[%s271 + $0x3c] sm:$0xf]
        %v344 = vld [vmem:[%s271 + $0x40] sm:$0xf]
        %v345 = vld [vmem:[%s271 + $0x44] sm:$0xf]
        %v346 = vld [vmem:[%s271 + $0x48] sm:$0xf]
        %v347 = vld [vmem:[%s271 + $0x4c] sm:$0xf]
        %v348 = vld [vmem:[%s271 + $0x50] sm:$0xf]
        %v349 = vld [vmem:[%s271 + $0x54] sm:$0xf]
        %v350 = vld [vmem:[%s271 + $0x58] sm:$0xf]
        %v351 = vld [vmem:[%s271 + $0x5c] sm:$0xf]
        %v352 = vld [vmem:[%s271 + $0x60] sm:$0xf]
        %v353 = vld [vmem:[%s271 + $0x64] sm:$0xf]
        %v354 = vld [vmem:[%s271 + $0x68] sm:$0xf]
        %v355 = vld [vmem:[%s271 + $0x6c] sm:$0xf]
        %v356 = vld [vmem:[%s271 + $0x70] sm:$0xf]
        %v357 = vld [vmem:[%s271 + $0x74] sm:$0xf]
        %v358 = vld [vmem:[%s271 + $0x78] sm:$0xf]
        %v359 = vld [vmem:[%s271 + $0x7c] sm:$0xf]
        %v360 = vld [vmem:[#allocation7] sm:$0xf]
        %v361 = vld [vmem:[#allocation7 + $0x4] sm:$0xf]
        %v362 = vld [vmem:[#allocation7 + $0x8] sm:$0xf]
        %v363 = vld [vmem:[#allocation7 + $0xc] sm:$0xf]
        %v364 = vld [vmem:[#allocation7 + $0x10] sm:$0xf]
        %v365 = vld [vmem:[#allocation7 + $0x14] sm:$0xf]
        %v366 = vld [vmem:[#allocation7 + $0x18] sm:$0xf]
        %v367 = vld [vmem:[#allocation7 + $0x1c] sm:$0xf]
        %v368 = vld [vmem:[#allocation7 + $0x20] sm:$0xf]
        %v369 = vld [vmem:[#allocation7 + $0x24] sm:$0xf]
        %v370 = vld [vmem:[#allocation7 + $0x28] sm:$0xf]
        %v371 = vld [vmem:[#allocation7 + $0x2c] sm:$0xf]
        %v372 = vld [vmem:[#allocation7 + $0x30] sm:$0xf]
        %v373 = vld [vmem:[#allocation7 + $0x34] sm:$0xf]
        %v374 = vld [vmem:[#allocation7 + $0x38] sm:$0xf]
        %v375 = vld [vmem:[#allocation7 + $0x3c] sm:$0xf]
        %v376 = vld [vmem:[%s280] sm:$0xf]
        %v377 = vld [vmem:[%s280 + $0x4] sm:$0xf]
        %v378 = vld [vmem:[%s280 + $0x8] sm:$0xf]
        %v379 = vld [vmem:[%s280 + $0xc] sm:$0xf]
        %v380 = vld [vmem:[%s280 + $0x10] sm:$0xf]
        %v381 = vld [vmem:[%s280 + $0x14] sm:$0xf]
        %v382 = vld [vmem:[%s280 + $0x18] sm:$0xf]
        %v383 = vld [vmem:[%s280 + $0x1c] sm:$0xf]
        %v384 = vld [vmem:[%s280 + $0x20] sm:$0xf]
        %v385 = vld [vmem:[%s280 + $0x24] sm:$0xf]
        %v386 = vld [vmem:[%s280 + $0x28] sm:$0xf]
        %v387 = vld [vmem:[%s280 + $0x2c] sm:$0xf]
        %v388 = vld [vmem:[%s280 + $0x30] sm:$0xf]
        %v389 = vld [vmem:[%s280 + $0x34] sm:$0xf]
        %v390 = vld [vmem:[%s280 + $0x38] sm:$0xf]
        %v391 = vld [vmem:[%s280 + $0x3c] sm:$0xf]
        %v392 = vld [vmem:[%s280 + $0x40] sm:$0xf]
        %v393 = vld [vmem:[%s280 + $0x44] sm:$0xf]
        %v394 = vld [vmem:[%s280 + $0x48] sm:$0xf]
        %v395 = vld [vmem:[%s280 + $0x4c] sm:$0xf]
        %v396 = vld [vmem:[%s280 + $0x50] sm:$0xf]
        %v397 = vld [vmem:[%s280 + $0x54] sm:$0xf]
        %v398 = vld [vmem:[%s280 + $0x58] sm:$0xf]
        %v399 = vld [vmem:[%s280 + $0x5c] sm:$0xf]
        %v400 = vld [vmem:[%s280 + $0x60] sm:$0xf]
        %v401 = vld [vmem:[%s280 + $0x64] sm:$0xf]
        %v402 = vld [vmem:[%s280 + $0x68] sm:$0xf]
        %v403 = vld [vmem:[%s280 + $0x6c] sm:$0xf]
        %v404 = vld [vmem:[%s280 + $0x70] sm:$0xf]
        %v405 = vld [vmem:[%s280 + $0x74] sm:$0xf]
        %v406 = vld [vmem:[%s280 + $0x78] sm:$0xf]
        %v407 = vld [vmem:[%s280 + $0x7c] sm:$0xf]
        %v408 = vld [vmem:[#allocation8] sm:$0xf]
        %v409 = vld [vmem:[#allocation8 + $0x4] sm:$0xf]
        %v410 = vld [vmem:[#allocation8 + $0x8] sm:$0xf]
        %v411 = vld [vmem:[#allocation8 + $0xc] sm:$0xf]
        %v412 = vld [vmem:[#allocation8 + $0x10] sm:$0xf]
        %v413 = vld [vmem:[#allocation8 + $0x14] sm:$0xf]
        %v414 = vld [vmem:[#allocation8 + $0x18] sm:$0xf]
        %v415 = vld [vmem:[#allocation8 + $0x1c] sm:$0xf]
        %v416 = vld [vmem:[#allocation8 + $0x20] sm:$0xf]
        %v417 = vld [vmem:[#allocation8 + $0x24] sm:$0xf]
        %v418 = vld [vmem:[#allocation8 + $0x28] sm:$0xf]
        %v419 = vld [vmem:[#allocation8 + $0x2c] sm:$0xf]
        %v420 = vld [vmem:[#allocation8 + $0x30] sm:$0xf]
        %v421 = vld [vmem:[#allocation8 + $0x34] sm:$0xf]
        %v422 = vld [vmem:[#allocation8 + $0x38] sm:$0xf]
        %v423 = vld [vmem:[#allocation8 + $0x3c] sm:$0xf]
        %v456 = vunpack.c.l.b16 %v376
        %v457 = vunpack.c.l.b16 %v377
        %v458 = vunpack.c.l.b16 %v378
        %v459 = vunpack.c.l.b16 %v379
        %v460 = vunpack.c.l.b16 %v380
        %v461 = vunpack.c.l.b16 %v381
        %v462 = vunpack.c.l.b16 %v382
        %v463 = vunpack.c.l.b16 %v383
        %v464 = vunpack.c.l.b16 %v384
        %v465 = vunpack.c.l.b16 %v385
        %v466 = vunpack.c.l.b16 %v386
        %v467 = vunpack.c.l.b16 %v387
        %v468 = vunpack.c.l.b16 %v388
        %v469 = vunpack.c.l.b16 %v389
        %v470 = vunpack.c.l.b16 %v390
        %v471 = vunpack.c.l.b16 %v391
        %v472 = vunpack.c.l.b16 %v392
        %v473 = vunpack.c.l.b16 %v393
        %v474 = vunpack.c.l.b16 %v394
        %v475 = vunpack.c.l.b16 %v395
        %v476 = vunpack.c.l.b16 %v396
        %v477 = vunpack.c.l.b16 %v397
        %v478 = vunpack.c.l.b16 %v398
        %v479 = vunpack.c.l.b16 %v399
        %v480 = vunpack.c.l.b16 %v400
        %v481 = vunpack.c.l.b16 %v401
        %v482 = vunpack.c.l.b16 %v402
        %v483 = vunpack.c.l.b16 %v403
        %v484 = vunpack.c.l.b16 %v404
        %v485 = vunpack.c.l.b16 %v405
        %v486 = vunpack.c.l.b16 %v406
        %v487 = vunpack.c.l.b16 %v407
        %v488 = vpack.c.b16 %v457, %v456
        %v489 = vpack.c.b16 %v459, %v458
        %v490 = vpack.c.b16 %v461, %v460
        %v491 = vpack.c.b16 %v463, %v462
        %v492 = vpack.c.b16 %v465, %v464
        %v493 = vpack.c.b16 %v467, %v466
        %v494 = vpack.c.b16 %v469, %v468
        %v495 = vpack.c.b16 %v471, %v470
        %v496 = vpack.c.b16 %v473, %v472
        %v497 = vpack.c.b16 %v475, %v474
        %v498 = vpack.c.b16 %v477, %v476
        %v499 = vpack.c.b16 %v479, %v478
        %v500 = vpack.c.b16 %v481, %v480
        %v501 = vpack.c.b16 %v483, %v482
        %v502 = vpack.c.b16 %v485, %v484
        %v503 = vpack.c.b16 %v487, %v486
        %v536 = vunpack.c.l.b16 %v408
        %v537 = vunpack.c.l.b16 %v409
        %v538 = vunpack.c.l.b16 %v410
        %v539 = vunpack.c.l.b16 %v411
        %v540 = vunpack.c.l.b16 %v412
        %v541 = vunpack.c.l.b16 %v413
        %v542 = vunpack.c.l.b16 %v414
        %v543 = vunpack.c.l.b16 %v415
        %v544 = vunpack.c.l.b16 %v416
        %v545 = vunpack.c.l.b16 %v417
        %v546 = vunpack.c.l.b16 %v418
        %v547 = vunpack.c.l.b16 %v419
        %v548 = vunpack.c.l.b16 %v420
        %v549 = vunpack.c.l.b16 %v421
        %v550 = vunpack.c.l.b16 %v422
        %v551 = vunpack.c.l.b16 %v423
        %v552 = vpack.c.b16 %v537, %v536
        %v553 = vpack.c.b16 %v539, %v538
        %v554 = vpack.c.b16 %v541, %v540
        %v555 = vpack.c.b16 %v543, %v542
        %v556 = vpack.c.b16 %v545, %v544
        %v557 = vpack.c.b16 %v547, %v546
        %v558 = vpack.c.b16 %v549, %v548
        %v559 = vpack.c.b16 %v551, %v550
        %568 = vmatprep.subr.bf16.mxu0 0
        %569 = vmatpush1.bf16.msra.mxu0 %v552
        %570 = vmatprep.subr.bf16.mxu0 0
        %571 = vmatpush1.bf16.msra.mxu0 %v553
        %572 = vmatprep.subr.bf16.mxu0 0
        %573 = vmatpush1.bf16.msra.mxu0 %v554
        %574 = vmatprep.subr.bf16.mxu0 0
        %575 = vmatpush1.bf16.msra.mxu0 %v555
        %576 = vmatprep.subr.bf16.mxu0 0
        %577 = vmatpush1.bf16.msra.mxu0 %v556
        %578 = vmatprep.subr.bf16.mxu0 0
        %579 = vmatpush1.bf16.msra.mxu0 %v557
        %580 = vmatprep.subr.bf16.mxu0 0
        %581 = vmatpush1.bf16.msra.mxu0 %v558
        %582 = vmatprep.subr.bf16.mxu0 0
        %583 = vmatpush1.bf16.msra.mxu0 %v559
        %584 = vmatprep.subr.bf16.mxu0 0
        %585 = vmatpush1.bf16.msra.mxu0 0
        %586 = vmatprep.subr.bf16.mxu0 0
        %587 = vmatpush1.bf16.msra.mxu0 0
        %588 = vmatprep.subr.bf16.mxu0 0
        %589 = vmatpush1.bf16.msra.mxu0 0
        %590 = vmatprep.subr.bf16.mxu0 0
        %591 = vmatpush1.bf16.msra.mxu0 0
        %592 = vmatprep.subr.bf16.mxu0 0
        %593 = vmatpush1.bf16.msra.mxu0 0
        %594 = vmatprep.subr.bf16.mxu0 0
        %595 = vmatpush1.bf16.msra.mxu0 0
        %596 = vmatprep.subr.bf16.mxu0 0
        %597 = vmatpush1.bf16.msra.mxu0 0
        %598 = vmatprep.subr.bf16.mxu0 0
        %599 = vmatpush1.bf16.msra.mxu0 0
        %600 = vmatprep.mubr.bf16.mxu0 0
        %601 = vmatmul.mubr.bf16.gmra.mrb[0].mxu0 %v488
        %v602 = vpop.f32.mrb[0].mxu0
        %v603 = vadd.f32 0.0, %v602
        %v604 = vpop.f32.mrb[0].mxu0
        %v605 = vpop.f32.mrb[0].mxu0
        %v606 = vadd.f32 0.0, %v605
        %v607 = vpop.f32.mrb[0].mxu0
        %608 = vmatprep.mubr.bf16.mxu0 0
        %609 = vmatmul.mubr.bf16.gmra.mrb[0].mxu0 %v489
        %v610 = vpop.f32.mrb[0].mxu0
        %v611 = vadd.f32 0.0, %v610
        %v612 = vpop.f32.mrb[0].mxu0
        %v613 = vpop.f32.mrb[0].mxu0
        %v614 = vadd.f32 0.0, %v613
        %v615 = vpop.f32.mrb[0].mxu0
        %616 = vmatprep.mubr.bf16.mxu0 0
        %617 = vmatmul.mubr.bf16.gmra.mrb[0].mxu0 %v490
        %v618 = vpop.f32.mrb[0].mxu0
        %v619 = vadd.f32 0.0, %v618
        %v620 = vpop.f32.mrb[0].mxu0
        %v621 = vpop.f32.mrb[0].mxu0
        %v622 = vadd.f32 0.0, %v621
        %v623 = vpop.f32.mrb[0].mxu0
        %624 = vmatprep.mubr.bf16.mxu0 0
        %625 = vmatmul.mubr.bf16.gmra.mrb[0].mxu0 %v491
        %v626 = vpop.f32.mrb[0].mxu0
        %v627 = vadd.f32 0.0, %v626
        %v628 = vpop.f32.mrb[0].mxu0
        %v629 = vpop.f32.mrb[0].mxu0
        %v630 = vadd.f32 0.0, %v629
        %v631 = vpop.f32.mrb[0].mxu0
        %632 = vmatprep.mubr.bf16.mxu0 0
        %633 = vmatmul.mubr.bf16.gmra.mrb[0].mxu0 %v492
        %v634 = vpop.f32.mrb[0].mxu0
        %v635 = vadd.f32 0.0, %v634
        %v636 = vpop.f32.mrb[0].mxu0
        %v637 = vpop.f32.mrb[0].mxu0
        %v638 = vadd.f32 0.0, %v637
        %v639 = vpop.f32.mrb[0].mxu0
        %640 = vmatprep.mubr.bf16.mxu0 0
        %641 = vmatmul.mubr.bf16.gmra.mrb[0].mxu0 %v493
        %v642 = vpop.f32.mrb[0].mxu0
        %v643 = vadd.f32 0.0, %v642
        %v644 = vpop.f32.mrb[0].mxu0
        %v645 = vpop.f32.mrb[0].mxu0
        %v646 = vadd.f32 0.0, %v645
        %v647 = vpop.f32.mrb[0].mxu0
        %648 = vmatprep.mubr.bf16.mxu0 0
        %649 = vmatmul.mubr.bf16.gmra.mrb[0].mxu0 %v494
        %v650 = vpop.f32.mrb[0].mxu0
        %v651 = vadd.f32 0.0, %v650
        %v652 = vpop.f32.mrb[0].mxu0
        %v653 = vpop.f32.mrb[0].mxu0
        %v654 = vadd.f32 0.0, %v653
        %v655 = vpop.f32.mrb[0].mxu0
        %656 = vmatprep.mubr.bf16.mxu0 0
        %657 = vmatmul.mubr.bf16.gmra.mrb[0].mxu0 %v495
        %v658 = vpop.f32.mrb[0].mxu0
        %v659 = vadd.f32 0.0, %v658
        %v660 = vpop.f32.mrb[0].mxu0
        %v661 = vpop.f32.mrb[0].mxu0
        %v662 = vadd.f32 0.0, %v661
        %v663 = vpop.f32.mrb[0].mxu0
        %664 = vmatprep.mubr.bf16.mxu0 0
        %665 = vmatmul.mubr.bf16.gmra.mrb[0].mxu0 %v496
        %v666 = vpop.f32.mrb[0].mxu0
        %v667 = vadd.f32 0.0, %v666
        %v668 = vpop.f32.mrb[0].mxu0
        %v669 = vpop.f32.mrb[0].mxu0
        %v670 = vadd.f32 0.0, %v669
        %v671 = vpop.f32.mrb[0].mxu0
        %672 = vmatprep.mubr.bf16.mxu0 0
        %673 = vmatmul.mubr.bf16.gmra.mrb[0].mxu0 %v497
        %v674 = vpop.f32.mrb[0].mxu0
        %v675 = vadd.f32 0.0, %v674
        %v676 = vpop.f32.mrb[0].mxu0
        %v677 = vpop.f32.mrb[0].mxu0
        %v678 = vadd.f32 0.0, %v677
        %v679 = vpop.f32.mrb[0].mxu0
        %680 = vmatprep.mubr.bf16.mxu0 0
        %681 = vmatmul.mubr.bf16.gmra.mrb[0].mxu0 %v498
        %v682 = vpop.f32.mrb[0].mxu0
        %v683 = vadd.f32 0.0, %v682
        %v684 = vpop.f32.mrb[0].mxu0
        %v685 = vpop.f32.mrb[0].mxu0
        %v686 = vadd.f32 0.0, %v685
        %v687 = vpop.f32.mrb[0].mxu0
        %688 = vmatprep.mubr.bf16.mxu0 0
        %689 = vmatmul.mubr.bf16.gmra.mrb[0].mxu0 %v499
        %v690 = vpop.f32.mrb[0].mxu0
        %v691 = vadd.f32 0.0, %v690
        %v692 = vpop.f32.mrb[0].mxu0
        %v693 = vpop.f32.mrb[0].mxu0
        %v694 = vadd.f32 0.0, %v693
        %v695 = vpop.f32.mrb[0].mxu0
        %696 = vmatprep.mubr.bf16.mxu0 0
        %697 = vmatmul.mubr.bf16.gmra.mrb[0].mxu0 %v500
        %v698 = vpop.f32.mrb[0].mxu0
        %v699 = vadd.f32 0.0, %v698
        %v700 = vpop.f32.mrb[0].mxu0
        %v701 = vpop.f32.mrb[0].mxu0
        %v702 = vadd.f32 0.0, %v701
        %v703 = vpop.f32.mrb[0].mxu0
        %704 = vmatprep.mubr.bf16.mxu0 0
        %705 = vmatmul.mubr.bf16.gmra.mrb[0].mxu0 %v501
        %v706 = vpop.f32.mrb[0].mxu0
        %v707 = vadd.f32 0.0, %v706
        %v708 = vpop.f32.mrb[0].mxu0
        %v709 = vpop.f32.mrb[0].mxu0
        %v710 = vadd.f32 0.0, %v709
        %v711 = vpop.f32.mrb[0].mxu0
        %712 = vmatprep.mubr.bf16.mxu0 0
        %713 = vmatmul.mubr.bf16.gmra.mrb[0].mxu0 %v502
        %v714 = vpop.f32.mrb[0].mxu0
        %v715 = vadd.f32 0.0, %v714
        %v716 = vpop.f32.mrb[0].mxu0
        %v717 = vpop.f32.mrb[0].mxu0
        %v718 = vadd.f32 0.0, %v717
        %v719 = vpop.f32.mrb[0].mxu0
        %720 = vmatprep.mubr.bf16.mxu0 0
        %721 = vmatmul.mubr.bf16.gmra.mrb[0].mxu0 %v503
        %v722 = vpop.f32.mrb[0].mxu0
        %v723 = vadd.f32 0.0, %v722
        %v724 = vpop.f32.mrb[0].mxu0
        %v725 = vpop.f32.mrb[0].mxu0
        %v726 = vadd.f32 0.0, %v725
        %v727 = vpop.f32.mrb[0].mxu0
        %728 = vdwg.mxu0
        %v761 = vunpack.c.l.b16 %v328
        %v762 = vunpack.c.l.b16 %v329
        %v763 = vunpack.c.l.b16 %v330
        %v764 = vunpack.c.l.b16 %v331
        %v765 = vunpack.c.l.b16 %v332
        %v766 = vunpack.c.l.b16 %v333
        %v767 = vunpack.c.l.b16 %v334
        %v768 = vunpack.c.l.b16 %v335
        %v769 = vunpack.c.l.b16 %v336
        %v770 = vunpack.c.l.b16 %v337
        %v771 = vunpack.c.l.b16 %v338
        %v772 = vunpack.c.l.b16 %v339
        %v773 = vunpack.c.l.b16 %v340
        %v774 = vunpack.c.l.b16 %v341
        %v775 = vunpack.c.l.b16 %v342
        %v776 = vunpack.c.l.b16 %v343
        %v777 = vunpack.c.l.b16 %v344
        %v778 = vunpack.c.l.b16 %v345
        %v779 = vunpack.c.l.b16 %v346
        %v780 = vunpack.c.l.b16 %v347
        %v781 = vunpack.c.l.b16 %v348
        %v782 = vunpack.c.l.b16 %v349
        %v783 = vunpack.c.l.b16 %v350
        %v784 = vunpack.c.l.b16 %v351
        %v785 = vunpack.c.l.b16 %v352
        %v786 = vunpack.c.l.b16 %v353
        %v787 = vunpack.c.l.b16 %v354
        %v788 = vunpack.c.l.b16 %v355
        %v789 = vunpack.c.l.b16 %v356
        %v790 = vunpack.c.l.b16 %v357
        %v791 = vunpack.c.l.b16 %v358
        %v792 = vunpack.c.l.b16 %v359
        %v793 = vpack.c.b16 %v762, %v761
        %v794 = vpack.c.b16 %v764, %v763
        %v795 = vpack.c.b16 %v766, %v765
        %v796 = vpack.c.b16 %v768, %v767
        %v797 = vpack.c.b16 %v770, %v769
        %v798 = vpack.c.b16 %v772, %v771
        %v799 = vpack.c.b16 %v774, %v773
        %v800 = vpack.c.b16 %v776, %v775
        %v801 = vpack.c.b16 %v778, %v777
        %v802 = vpack.c.b16 %v780, %v779
        %v803 = vpack.c.b16 %v782, %v781
        %v804 = vpack.c.b16 %v784, %v783
        %v805 = vpack.c.b16 %v786, %v785
        %v806 = vpack.c.b16 %v788, %v787
        %v807 = vpack.c.b16 %v790, %v789
        %v808 = vpack.c.b16 %v792, %v791
        %v841 = vunpack.c.l.b16 %v360
        %v842 = vunpack.c.l.b16 %v361
        %v843 = vunpack.c.l.b16 %v362
        %v844 = vunpack.c.l.b16 %v363
        %v845 = vunpack.c.l.b16 %v364
        %v846 = vunpack.c.l.b16 %v365
        %v847 = vunpack.c.l.b16 %v366
        %v848 = vunpack.c.l.b16 %v367
        %v849 = vunpack.c.l.b16 %v368
        %v850 = vunpack.c.l.b16 %v369
        %v851 = vunpack.c.l.b16 %v370
        %v852 = vunpack.c.l.b16 %v371
        %v853 = vunpack.c.l.b16 %v372
        %v854 = vunpack.c.l.b16 %v373
        %v855 = vunpack.c.l.b16 %v374
        %v856 = vunpack.c.l.b16 %v375
        %v857 = vpack.c.b16 %v842, %v841
        %v858 = vpack.c.b16 %v844, %v843
        %v859 = vpack.c.b16 %v846, %v845
        %v860 = vpack.c.b16 %v848, %v847
        %v861 = vpack.c.b16 %v850, %v849
        %v862 = vpack.c.b16 %v852, %v851
        %v863 = vpack.c.b16 %v854, %v853
        %v864 = vpack.c.b16 %v856, %v855
        %873 = vmatprep.subr.bf16.mxu0 0
        %874 = vmatpush1.bf16.msra.mxu0 %v857
        %875 = vmatprep.subr.bf16.mxu0 0
        %876 = vmatpush1.bf16.msra.mxu0 %v858
        %877 = vmatprep.subr.bf16.mxu0 0
        %878 = vmatpush1.bf16.msra.mxu0 %v859
        %879 = vmatprep.subr.bf16.mxu0 0
        %880 = vmatpush1.bf16.msra.mxu0 %v860
        %881 = vmatprep.subr.bf16.mxu0 0
        %882 = vmatpush1.bf16.msra.mxu0 %v861
        %883 = vmatprep.subr.bf16.mxu0 0
        %884 = vmatpush1.bf16.msra.mxu0 %v862
        %885 = vmatprep.subr.bf16.mxu0 0
        %886 = vmatpush1.bf16.msra.mxu0 %v863
        %887 = vmatprep.subr.bf16.mxu0 0
        %888 = vmatpush1.bf16.msra.mxu0 %v864
        %889 = vmatprep.subr.bf16.mxu0 0
        %890 = vmatpush1.bf16.msra.mxu0 0
        %891 = vmatprep.subr.bf16.mxu0 0
        %892 = vmatpush1.bf16.msra.mxu0 0
        %893 = vmatprep.subr.bf16.mxu0 0
        %894 = vmatpush1.bf16.msra.mxu0 0
        %895 = vmatprep.subr.bf16.mxu0 0
        %896 = vmatpush1.bf16.msra.mxu0 0
        %897 = vmatprep.subr.bf16.mxu0 0
        %898 = vmatpush1.bf16.msra.mxu0 0
        %899 = vmatprep.subr.bf16.mxu0 0
        %900 = vmatpush1.bf16.msra.mxu0 0
        %901 = vmatprep.subr.bf16.mxu0 0
        %902 = vmatpush1.bf16.msra.mxu0 0
        %903 = vmatprep.subr.bf16.mxu0 0
        %904 = vmatpush1.bf16.msra.mxu0 0
        %905 = vmatprep.mubr.bf16.mxu0 0
        %906 = vmatmul.mubr.bf16.gmra.mrb[0].mxu0 %v793
        %v907 = vpop.f32.mrb[0].mxu0
        %v908 = vadd.f32 %v603, %v907
        %v909 = vpop.f32.mrb[0].mxu0
        %v910 = vpop.f32.mrb[0].mxu0
        %v911 = vadd.f32 %v606, %v910
        %v912 = vpop.f32.mrb[0].mxu0
        %913 = vmatprep.mubr.bf16.mxu0 0
        %914 = vmatmul.mubr.bf16.gmra.mrb[0].mxu0 %v794
        %v915 = vpop.f32.mrb[0].mxu0
        %v916 = vadd.f32 %v611, %v915
        %v917 = vpop.f32.mrb[0].mxu0
        %v918 = vpop.f32.mrb[0].mxu0
        %v919 = vadd.f32 %v614, %v918
        %v920 = vpop.f32.mrb[0].mxu0
        %921 = vmatprep.mubr.bf16.mxu0 0
        %922 = vmatmul.mubr.bf16.gmra.mrb[0].mxu0 %v795
        %v923 = vpop.f32.mrb[0].mxu0
        %v924 = vadd.f32 %v619, %v923
        %v925 = vpop.f32.mrb[0].mxu0
        %v926 = vpop.f32.mrb[0].mxu0
        %v927 = vadd.f32 %v622, %v926
        %v928 = vpop.f32.mrb[0].mxu0
        %929 = vmatprep.mubr.bf16.mxu0 0
        %930 = vmatmul.mubr.bf16.gmra.mrb[0].mxu0 %v796
        %v931 = vpop.f32.mrb[0].mxu0
        %v932 = vadd.f32 %v627, %v931
        %v933 = vpop.f32.mrb[0].mxu0
        %v934 = vpop.f32.mrb[0].mxu0
        %v935 = vadd.f32 %v630, %v934
        %v936 = vpop.f32.mrb[0].mxu0
        %937 = vmatprep.mubr.bf16.mxu0 0
        %938 = vmatmul.mubr.bf16.gmra.mrb[0].mxu0 %v797
        %v939 = vpop.f32.mrb[0].mxu0
        %v940 = vadd.f32 %v635, %v939
        %v941 = vpop.f32.mrb[0].mxu0
        %v942 = vpop.f32.mrb[0].mxu0
        %v943 = vadd.f32 %v638, %v942
        %v944 = vpop.f32.mrb[0].mxu0
        %945 = vmatprep.mubr.bf16.mxu0 0
        %946 = vmatmul.mubr.bf16.gmra.mrb[0].mxu0 %v798
        %v947 = vpop.f32.mrb[0].mxu0
        %v948 = vadd.f32 %v643, %v947
        %v949 = vpop.f32.mrb[0].mxu0
        %v950 = vpop.f32.mrb[0].mxu0
        %v951 = vadd.f32 %v646, %v950
        %v952 = vpop.f32.mrb[0].mxu0
        %953 = vmatprep.mubr.bf16.mxu0 0
        %954 = vmatmul.mubr.bf16.gmra.mrb[0].mxu0 %v799
        %v955 = vpop.f32.mrb[0].mxu0
        %v956 = vadd.f32 %v651, %v955
        %v957 = vpop.f32.mrb[0].mxu0
        %v958 = vpop.f32.mrb[0].mxu0
        %v959 = vadd.f32 %v654, %v958
        %v960 = vpop.f32.mrb[0].mxu0
        %961 = vmatprep.mubr.bf16.mxu0 0
        %962 = vmatmul.mubr.bf16.gmra.mrb[0].mxu0 %v800
        %v963 = vpop.f32.mrb[0].mxu0
        %v964 = vadd.f32 %v659, %v963
        %v965 = vpop.f32.mrb[0].mxu0
        %v966 = vpop.f32.mrb[0].mxu0
        %v967 = vadd.f32 %v662, %v966
        %v968 = vpop.f32.mrb[0].mxu0
        %969 = vmatprep.mubr.bf16.mxu0 0
        %970 = vmatmul.mubr.bf16.gmra.mrb[0].mxu0 %v801
        %v971 = vpop.f32.mrb[0].mxu0
        %v972 = vadd.f32 %v667, %v971
        %v973 = vpop.f32.mrb[0].mxu0
        %v974 = vpop.f32.mrb[0].mxu0
        %v975 = vadd.f32 %v670, %v974
        %v976 = vpop.f32.mrb[0].mxu0
        %977 = vmatprep.mubr.bf16.mxu0 0
        %978 = vmatmul.mubr.bf16.gmra.mrb[0].mxu0 %v802
        %v979 = vpop.f32.mrb[0].mxu0
        %v980 = vadd.f32 %v675, %v979
        %v981 = vpop.f32.mrb[0].mxu0
        %v982 = vpop.f32.mrb[0].mxu0
        %v983 = vadd.f32 %v678, %v982
        %v984 = vpop.f32.mrb[0].mxu0
        %985 = vmatprep.mubr.bf16.mxu0 0
        %986 = vmatmul.mubr.bf16.gmra.mrb[0].mxu0 %v803
        %v987 = vpop.f32.mrb[0].mxu0
        %v988 = vadd.f32 %v683, %v987
        %v989 = vpop.f32.mrb[0].mxu0
        %v990 = vpop.f32.mrb[0].mxu0
        %v991 = vadd.f32 %v686, %v990
        %v992 = vpop.f32.mrb[0].mxu0
        %993 = vmatprep.mubr.bf16.mxu0 0
        %994 = vmatmul.mubr.bf16.gmra.mrb[0].mxu0 %v804
        %v995 = vpop.f32.mrb[0].mxu0
        %v996 = vadd.f32 %v691, %v995
        %v997 = vpop.f32.mrb[0].mxu0
        %v998 = vpop.f32.mrb[0].mxu0
        %v999 = vadd.f32 %v694, %v998
        %v1000 = vpop.f32.mrb[0].mxu0
        %1001 = vmatprep.mubr.bf16.mxu0 0
        %1002 = vmatmul.mubr.bf16.gmra.mrb[0].mxu0 %v805
        %v1003 = vpop.f32.mrb[0].mxu0
        %v1004 = vadd.f32 %v699, %v1003
        %v1005 = vpop.f32.mrb[0].mxu0
        %v1006 = vpop.f32.mrb[0].mxu0
        %v1007 = vadd.f32 %v702, %v1006
        %v1008 = vpop.f32.mrb[0].mxu0
        %1009 = vmatprep.mubr.bf16.mxu0 0
        %1010 = vmatmul.mubr.bf16.gmra.mrb[0].mxu0 %v806
        %v1011 = vpop.f32.mrb[0].mxu0
        %v1012 = vadd.f32 %v707, %v1011
        %v1013 = vpop.f32.mrb[0].mxu0
        %v1014 = vpop.f32.mrb[0].mxu0
        %v1015 = vadd.f32 %v710, %v1014
        %v1016 = vpop.f32.mrb[0].mxu0
        %1017 = vmatprep.mubr.bf16.mxu0 0
        %1018 = vmatmul.mubr.bf16.gmra.mrb[0].mxu0 %v807
        %v1019 = vpop.f32.mrb[0].mxu0
        %v1020 = vadd.f32 %v715, %v1019
        %v1021 = vpop.f32.mrb[0].mxu0
        %v1022 = vpop.f32.mrb[0].mxu0
        %v1023 = vadd.f32 %v718, %v1022
        %v1024 = vpop.f32.mrb[0].mxu0
        %1025 = vmatprep.mubr.bf16.mxu0 0
        %1026 = vmatmul.mubr.bf16.gmra.mrb[0].mxu0 %v808
        %v1027 = vpop.f32.mrb[0].mxu0
        %v1028 = vadd.f32 %v723, %v1027
        %v1029 = vpop.f32.mrb[0].mxu0
        %v1030 = vpop.f32.mrb[0].mxu0
        %v1031 = vadd.f32 %v726, %v1030
        %v1032 = vpop.f32.mrb[0].mxu0
        %1033 = vdwg.mxu0
        %v1034 = vld [vmem:[#allocation10] sm:$0x1]
        %v1036 = vlaneseq
        %v1037 = vshrl.u32 %v1036, 7
        %v1038 = vsub.s32 0, %v1037
        %v1039 = vrot.slane %v1034, %v1038
        %v1041 = vadd.f32 %v908, %v1039
        %v1042 = vadd.f32 %v911, %v1039
        %v1043 = vadd.f32 %v916, %v1039
        %v1044 = vadd.f32 %v919, %v1039
        %v1045 = vadd.f32 %v924, %v1039
        %v1046 = vadd.f32 %v927, %v1039
        %v1047 = vadd.f32 %v932, %v1039
        %v1048 = vadd.f32 %v935, %v1039
        %v1049 = vadd.f32 %v940, %v1039
        %v1050 = vadd.f32 %v943, %v1039
        %v1051 = vadd.f32 %v948, %v1039
        %v1052 = vadd.f32 %v951, %v1039
        %v1053 = vadd.f32 %v956, %v1039
        %v1054 = vadd.f32 %v959, %v1039
        %v1055 = vadd.f32 %v964, %v1039
        %v1056 = vadd.f32 %v967, %v1039
        %v1057 = vadd.f32 %v972, %v1039
        %v1058 = vadd.f32 %v975, %v1039
        %v1059 = vadd.f32 %v980, %v1039
        %v1060 = vadd.f32 %v983, %v1039
        %v1061 = vadd.f32 %v988, %v1039
        %v1062 = vadd.f32 %v991, %v1039
        %v1063 = vadd.f32 %v996, %v1039
        %v1064 = vadd.f32 %v999, %v1039
        %v1065 = vadd.f32 %v1004, %v1039
        %v1066 = vadd.f32 %v1007, %v1039
        %v1067 = vadd.f32 %v1012, %v1039
        %v1068 = vadd.f32 %v1015, %v1039
        %v1069 = vadd.f32 %v1020, %v1039
        %v1070 = vadd.f32 %v1023, %v1039
        %v1071 = vadd.f32 %v1028, %v1039
        %v1072 = vadd.f32 %v1031, %v1039
        %v1073 = vmax.f32 %v1041, 0.0
        %v1074 = vmax.f32 %v1042, 0.0
        %v1075 = vmax.f32 %v1043, 0.0
        %v1076 = vmax.f32 %v1044, 0.0
        %v1077 = vmax.f32 %v1045, 0.0
        %v1078 = vmax.f32 %v1046, 0.0
        %v1079 = vmax.f32 %v1047, 0.0
        %v1080 = vmax.f32 %v1048, 0.0
        %v1081 = vmax.f32 %v1049, 0.0
        %v1082 = vmax.f32 %v1050, 0.0
        %v1083 = vmax.f32 %v1051, 0.0
        %v1084 = vmax.f32 %v1052, 0.0
        %v1085 = vmax.f32 %v1053, 0.0
        %v1086 = vmax.f32 %v1054, 0.0
        %v1087 = vmax.f32 %v1055, 0.0
        %v1088 = vmax.f32 %v1056, 0.0
        %v1089 = vmax.f32 %v1057, 0.0
        %v1090 = vmax.f32 %v1058, 0.0
        %v1091 = vmax.f32 %v1059, 0.0
        %v1092 = vmax.f32 %v1060, 0.0
        %v1093 = vmax.f32 %v1061, 0.0
        %v1094 = vmax.f32 %v1062, 0.0
        %v1095 = vmax.f32 %v1063, 0.0
        %v1096 = vmax.f32 %v1064, 0.0
        %v1097 = vmax.f32 %v1065, 0.0
        %v1098 = vmax.f32 %v1066, 0.0
        %v1099 = vmax.f32 %v1067, 0.0
        %v1100 = vmax.f32 %v1068, 0.0
        %v1101 = vmax.f32 %v1069, 0.0
        %v1102 = vmax.f32 %v1070, 0.0
        %v1103 = vmax.f32 %v1071, 0.0
        %v1104 = vmax.f32 %v1072, 0.0
        %1105 = vst [vmem:[%s323] sm:$0xff] %v1073
        %1106 = vst [vmem:[%s323 + $0x8] sm:$0xff] %v1074
        %1107 = vst [vmem:[%s323 + $0x10] sm:$0xff] %v1075
        %1108 = vst [vmem:[%s323 + $0x18] sm:$0xff] %v1076
        %1109 = vst [vmem:[%s323 + $0x20] sm:$0xff] %v1077
        %1110 = vst [vmem:[%s323 + $0x28] sm:$0xff] %v1078
        %1111 = vst [vmem:[%s323 + $0x30] sm:$0xff] %v1079
        %1112 = vst [vmem:[%s323 + $0x38] sm:$0xff] %v1080
        %1113 = vst [vmem:[%s323 + $0x40] sm:$0xff] %v1081
        %1114 = vst [vmem:[%s323 + $0x48] sm:$0xff] %v1082
        %1115 = vst [vmem:[%s323 + $0x50] sm:$0xff] %v1083
        %1116 = vst [vmem:[%s323 + $0x58] sm:$0xff] %v1084
        %1117 = vst [vmem:[%s323 + $0x60] sm:$0xff] %v1085
        %1118 = vst [vmem:[%s323 + $0x68] sm:$0xff] %v1086
        %1119 = vst [vmem:[%s323 + $0x70] sm:$0xff] %v1087
        %1120 = vst [vmem:[%s323 + $0x78] sm:$0xff] %v1088
        %1121 = vst [vmem:[%s323 + $0x80] sm:$0xff] %v1089
        %1122 = vst [vmem:[%s323 + $0x88] sm:$0xff] %v1090
        %1123 = vst [vmem:[%s323 + $0x90] sm:$0xff] %v1091
        %1124 = vst [vmem:[%s323 + $0x98] sm:$0xff] %v1092
        %1125 = vst [vmem:[%s323 + $0xa0] sm:$0xff] %v1093
        %1126 = vst [vmem:[%s323 + $0xa8] sm:$0xff] %v1094
        %1127 = vst [vmem:[%s323 + $0xb0] sm:$0xff] %v1095
        %1128 = vst [vmem:[%s323 + $0xb8] sm:$0xff] %v1096
        %1129 = vst [vmem:[%s323 + $0xc0] sm:$0xff] %v1097
        %1130 = vst [vmem:[%s323 + $0xc8] sm:$0xff] %v1098
        %1131 = vst [vmem:[%s323 + $0xd0] sm:$0xff] %v1099
        %1132 = vst [vmem:[%s323 + $0xd8] sm:$0xff] %v1100
        %1133 = vst [vmem:[%s323 + $0xe0] sm:$0xff] %v1101
        %1134 = vst [vmem:[%s323 + $0xe8] sm:$0xff] %v1102
        %1135 = vst [vmem:[%s323 + $0xf0] sm:$0xff] %v1103
        %1136 = vst [vmem:[%s323 + $0xf8] sm:$0xff] %v1104
        %s1137 = sand.u32 %s149, 1
        %s1138 = scalar_lea.sflag [#allocation4], %s1137
        %s1139 = sand.u32 %s149, 1
        %s1140 = smul.addr %s1139, 256
        %s1141 = scalar_lea.vmem [#allocation11], %s1140
        // Predicated region
        $region61: #{tpu_custom_call.1} parent=39 // pred_check
          %p1142 = pneg %p159
        $region62: #{tpu_custom_call.1} parent=39 // pred_check_branch
          %1144 = sbr.rel (%p1142) target = $region64
        $region63: #{tpu_custom_call.1} parent=39 // pred_region
          %s1145 = smul.u32 32, %s26
          %s1147 = ssub.s32 4096, 4096
          %1148 = vsyncadd %s1138, %s1147
          %s1149 = smul.addr %s1145, 128
          %s1150 = scalar_lea.hbm %s5, %s1149
          %s1151 = sshll.u32 %s1141, 4
          %s1152 = int_to_ptr.vmem [resolvable:$true] %s1151
          %1157 = dma.vmem_to_hbm [thread:$0]  %s1152, 4096, %s1150, %s1138, 128, 128, 8
        $region64: #{tpu_custom_call.1} parent=39 // pred_fallthru
          _
      $region40: #{tpu_custom_call.1} parent=5 // pred_fallthru
        _
      %p1158 = scmp.le.s32.totalorder 2, %s21
      // Predicated region
      $region65: #{tpu_custom_call.1} parent=5 // pred_check
        %p1159 = pneg %p1158
      $region66: #{tpu_custom_call.1} parent=5 // pred_check_branch
        %1161 = sbr.rel (%p1159) target = $region68
      $region67: #{tpu_custom_call.1} parent=5 // pred_region
        %s1162 = ssub.s32 %s21, 2
        // Predicated region
        $region69: #{tpu_custom_call.1} parent=67 // pred_check
          %p1163 = pneg %p165
        $region70: #{tpu_custom_call.1} parent=67 // pred_check_branch
          %1165 = sbr.rel (%p1163) target = $region72
        $region71: #{tpu_custom_call.1} parent=67 // pred_region
          %s1166 = sand.u32 %s150, 1
          %s1167 = scalar_lea.sflag [#allocation4], %s1166
          %s1168 = sand.u32 %s150, 1
          %s1169 = smul.addr %s1168, 256
          %s1170 = scalar_lea.vmem [#allocation11], %s1169
          %1171 = dma.done %s1167, 4096
        $region72: #{tpu_custom_call.1} parent=67 // pred_fallthru
          _
      $region68: #{tpu_custom_call.1} parent=5 // pred_fallthru
        _
    $region6: #{tpu_custom_call.1} parent=1 // loop_footer
      %s25 = sadd.s32 1, %s21
    $region7: #{tpu_custom_call.1} parent=1 // loop_footer_branch
      %20 = sbr.rel target = $region3
    $region8: #{tpu_custom_call.1} parent=1 // loop_exit
      _
    %1172 = vsyncpa [#allocation3], 1
    %s1173 = scalar_lea.sflag [#allocation3], 1
    %1174 = vsyncpa %s1173, 1
    %1175 = vsyncpa [#allocation6], 1
    %s1176 = scalar_lea.sflag [#allocation6], 1
    %1177 = vsyncpa %s1176, 1
    %1178 = vsyncpa [#allocation9], 1
    %1179 = vsyncpa [#allocation4], 1
    %s1180 = scalar_lea.sflag [#allocation4], 1
    %1181 = vsyncpa %s1180, 1

</llo_original>
